<compile_context>
chip_gen: v7x
topology: tpu7x:2x2x1
jax: 0.10.0
libtpu: 0.0.40
codegen_flags: <defaults>
</compile_context>

<pallas_src>
import jax
import jax.numpy as jnp
from jax import lax
from jax.experimental import pallas as pl
from jax.experimental.pallas import tpu as pltpu

_EPS = 1e-12   # torch.nn.functional.normalize default eps
_NEG = -1e30   # "minus infinity" for masking (finite -> no inf-inf NaN risk)


def _pick_tile(n: int, max_tile: int = 256) -> int:
    """Largest multiple-of-8 divisor of n that is <= max_tile, else n (full block)."""
    if n <= max_tile:
        return n
    for t in range(max_tile, 7, -8):
        if n % t == 0:
            return t
    return n  # no aligned divisor: single full-row block (correct, just untiled)


def _make_kernel(tile_r: int, tile_c: int, inv_t: float, matmul_dtype):
    dn = (((1,), (1,)), ((), ()))  # contract last (lane) dim of both operands

    def _normalize(x):
        x = x.astype(jnp.float32)
        ssq = jnp.sum(x * x, axis=1, keepdims=True)
        # x / max(||x||, eps)  ==  x * rsqrt(max(||x||^2, eps^2))
        return x * lax.rsqrt(jnp.maximum(ssq, _EPS * _EPS))

    def kernel(ei_row_ref, ej_row_ref, ei_col_ref, ej_col_ref, out_ref,
               zi_row, zj_row, pos, m_i, d_i, m_j, d_j):
        i = pl.program_id(0)          # row-tile index (over N pairs)
        j = pl.program_id(1)          # col-tile index (over N columns of each half)

        # --- once per row tile: normalize rows, positives, reset accumulators ---
        @pl.when(j == 0)
        def _():
            zi = _normalize(ei_row_ref[...])
            zj = _normalize(ej_row_ref[...])
            zi_row[...] = zi
            zj_row[...] = zj
            pos[...] = jnp.sum(zi * zj, axis=1, keepdims=True)   # zi·zj per row
            m_i[...] = jnp.full_like(m_i, _NEG)
            m_j[...] = jnp.full_like(m_j, _NEG)
            d_i[...] = jnp.zeros_like(d_i)
            d_j[...] = jnp.zeros_like(d_j)

        # --- column tile: normalize, 4 sub-blocks of the implicit 2Nx2N sim ---
        zci = _normalize(ei_col_ref[...])
        zcj = _normalize(ej_col_ref[...])

        zi_r = zi_row[...].astype(matmul_dtype)
        zj_r = zj_row[...].astype(matmul_dtype)
        zci = zci.astype(matmul_dtype)
        zcj = zcj.astype(matmul_dtype)

        s_ii = lax.dot_general(zi_r, zci, dn, preferred_element_type=jnp.float32) * inv_t
        s_ij = lax.dot_general(zi_r, zcj, dn, preferred_element_type=jnp.float32) * inv_t
        s_ji = lax.dot_general(zj_r, zci, dn, preferred_element_type=jnp.float32) * inv_t
        s_jj = lax.dot_general(zj_r, zcj, dn, preferred_element_type=jnp.float32) * inv_t

        # Global diagonal (self-similarity) only appears in s_ii / s_jj when i == j.
        eye = (lax.broadcasted_iota(jnp.int32, (tile_r, tile_c), 0)
               == lax.broadcasted_iota(jnp.int32, (tile_r, tile_c), 1))
        diag = jnp.logical_and(eye, i == j)
        s_ii = jnp.where(diag, _NEG, s_ii)
        s_jj = jnp.where(diag, _NEG, s_jj)

        def online_update(m_ref, d_ref, s_a, s_b):
            m_old = m_ref[...]
            t_max = jnp.maximum(jnp.max(s_a, axis=1, keepdims=True),
                                jnp.max(s_b, axis=1, keepdims=True))
            m_new = jnp.maximum(m_old, t_max)
            d_ref[...] = (d_ref[...] * jnp.exp(m_old - m_new)
                          + jnp.sum(jnp.exp(s_a - m_new), axis=1, keepdims=True)
                          + jnp.sum(jnp.exp(s_b - m_new), axis=1, keepdims=True))
            m_ref[...] = m_new

        online_update(m_i, d_i, s_ii, s_ij)   # rows of z_i (global rows [0, N))
        online_update(m_j, d_j, s_ji, s_jj)   # rows of z_j (global rows [N, 2N))

        # --- last column tile: emit per-row-pair loss partials for this block ---
        @pl.when(j == pl.num_programs(1) - 1)
        def _():
            logden_i = m_i[...] + jnp.log(d_i[...])
            logden_j = m_j[...] + jnp.log(d_j[...])
            # (logden_r - pos/T) + (logden_{r+N} - pos/T)
            out_ref[...] = logden_i + logden_j - 2.0 * inv_t * pos[...]

    return kernel


def contrastive_loss(emb_i, emb_j, *, temperature: float = 0.05, tile=None,
                     matmul_dtype=jnp.float32, vmem_limit_bytes=None):
    """NT-Xent loss, matching the PyTorch ContrastiveLoss forward."""
    N, D = emb_i.shape
    assert emb_j.shape == (N, D), (emb_i.shape, emb_j.shape)
    t = _pick_tile(N) if tile is None else tile
    assert N % t == 0 and (t == N or t % 8 == 0), f"bad tile {t} for N={N}"
    n_blk = N // t
    inv_t = 1.0 / float(temperature)

    kernel = _make_kernel(t, t, inv_t, matmul_dtype)

    row_spec = pl.BlockSpec((t, D), lambda i, j: (i, 0))
    col_spec = pl.BlockSpec((t, D), lambda i, j: (j, 0))

    per_pair = pl.pallas_call(
        kernel,
        out_shape=jax.ShapeDtypeStruct((N, 1), jnp.float32),
        grid=(n_blk, n_blk),
        in_specs=[row_spec, row_spec, col_spec, col_spec],
        out_specs=pl.BlockSpec((t, 1), lambda i, j: (i, 0)),
        scratch_shapes=[
            pltpu.VMEM((t, D), jnp.float32),   # normalized z_i rows (cached per row tile)
            pltpu.VMEM((t, D), jnp.float32),   # normalized z_j rows
            pltpu.VMEM((t, 1), jnp.float32),   # positives zi·zj
            pltpu.VMEM((t, 1), jnp.float32),   # running max   (z_i rows)
            pltpu.VMEM((t, 1), jnp.float32),   # running denom (z_i rows)
            pltpu.VMEM((t, 1), jnp.float32),   # running max   (z_j rows)
            pltpu.VMEM((t, 1), jnp.float32),   # running denom (z_j rows)
        ],
        compiler_params=pltpu.CompilerParams(
            dimension_semantics=("parallel", "arbitrary"),
            vmem_limit_bytes=vmem_limit_bytes,
        ),
    )(emb_i, emb_j, emb_i, emb_j)

    # Final reduction of N per-row-pair partials (tiny; kept outside the kernel so
    # the row-tile axis can stay "parallel" for v7x dual TensorCores).
    return jnp.sum(per_pair) / (2.0 * N)


def contrastive_loss_ref(emb_i, emb_j, temperature=0.05):
    # pure-JAX reference mirroring the PyTorch module
    eps = 1e-12
    zi = emb_i / jnp.maximum(jnp.linalg.norm(emb_i, axis=1, keepdims=True), eps)
    zj = emb_j / jnp.maximum(jnp.linalg.norm(emb_j, axis=1, keepdims=True), eps)
    reps = jnp.concatenate([zi, zj], axis=0)
    sim = reps @ reps.T
    N = emb_i.shape[0]
    sim_ij = jnp.diagonal(sim, offset=N)
    sim_ji = jnp.diagonal(sim, offset=-N)
    positives = jnp.concatenate([sim_ij, sim_ji], axis=0)
    neg_mask = 1.0 - jnp.eye(2 * N, dtype=jnp.float32)
    nominator = jnp.exp(positives / temperature)
    denominator = jnp.sum(neg_mask * jnp.exp(sim / temperature), axis=1)
    loss_partial = -jnp.log(nominator / denominator)
    return jnp.sum(loss_partial) / (2 * N)


if __name__ == "__main__":
    # Small deterministic example matching the module defaults: batch=16, hidden=32.
    batch_size, hidden = 16, 32
    key = jax.random.PRNGKey(0)
    k1, k2 = jax.random.split(key)
    emb_i = jax.random.normal(k1, (batch_size, hidden), dtype=jnp.float32)
    emb_j = jax.random.normal(k2, (batch_size, hidden), dtype=jnp.float32)

    loss = contrastive_loss(emb_i, emb_j, temperature=0.05)
    jax.block_until_ready(loss)
    ref = contrastive_loss_ref(emb_i, emb_j, 0.05)
    assert jnp.allclose(loss, ref, rtol=1e-4, atol=1e-5), (loss, ref)

    # Exercise the tiled / gridded path (grid = 3x3, online denominator accumulation).
    k3, k4 = jax.random.split(k2)
    Nbig, Dbig = 384, 64
    ei = jax.random.normal(k3, (Nbig, Dbig), dtype=jnp.float32)
    ej = jax.random.normal(k4, (Nbig, Dbig), dtype=jnp.float32)
    loss2 = contrastive_loss(ei, ej, temperature=0.05, tile=128)
    jax.block_until_ready(loss2)
    ref2 = contrastive_loss_ref(ei, ej, 0.05)
    assert jnp.allclose(loss2, ref2, rtol=1e-4, atol=1e-5), (loss2, ref2)

    print("KERNEL_OK")
</pallas_src>

<mosaic_0001>
module attributes {stable_mosaic.version = 11 : i64} {
  func.func @kernel(%arg0: i32, %arg1: i32, %arg2: memref<16x32xf32, #tpu.memory_space<vmem>>, %arg3: memref<16x32xf32, #tpu.memory_space<vmem>>, %arg4: memref<16x32xf32, #tpu.memory_space<vmem>>, %arg5: memref<16x32xf32, #tpu.memory_space<vmem>>, %arg6: memref<16x1xf32, #tpu.memory_space<vmem>>, %arg7: memref<16x32xf32, #tpu.memory_space<vmem>>, %arg8: memref<16x32xf32, #tpu.memory_space<vmem>>, %arg9: memref<16x1xf32, #tpu.memory_space<vmem>>, %arg10: memref<16x1xf32, #tpu.memory_space<vmem>>, %arg11: memref<16x1xf32, #tpu.memory_space<vmem>>, %arg12: memref<16x1xf32, #tpu.memory_space<vmem>>, %arg13: memref<16x1xf32, #tpu.memory_space<vmem>>) attributes {dimension_semantics = [#tpu.dimension_semantics<parallel>, #tpu.dimension_semantics<arbitrary>], iteration_bounds = array<i64: 1, 1>, scalar_prefetch = 0 : i64, scratch_operands = 7 : i64, tpu.core_type = #tpu.core_type<tc>, window_params = [{transform_indices = @transform_0, window_bounds = array<i64: 16, 32>}, {transform_indices = @transform_1, window_bounds = array<i64: 16, 32>}, {transform_indices = @transform_2, window_bounds = array<i64: 16, 32>}, {transform_indices = @transform_3, window_bounds = array<i64: 16, 32>}, {transform_indices = @transform_4, window_bounds = array<i64: 16, 1>}]} {
    %c0_i32 = arith.constant 0 : i32
    %0 = arith.cmpi eq, %arg1, %c0_i32 : i32
    %1 = arith.extui %0 : i1 to i32
    %c0_i32_0 = arith.constant 0 : i32
    %2 = arith.cmpi ne, %1, %c0_i32_0 : i32
    scf.if %2 {
      %c0_47 = arith.constant 0 : index
      %c0_48 = arith.constant 0 : index
      %98 = vector.load %arg2[%c0_47, %c0_48] : memref<16x32xf32, #tpu.memory_space<vmem>>, vector<16x32xf32>
      %99 = arith.mulf %98, %98 : vector<16x32xf32>
      %cst_49 = arith.constant dense<0.000000e+00> : vector<16xf32>
      %100 = vector.multi_reduction <add>, %99, %cst_49 [1] : vector<16x32xf32> to vector<16xf32>
      %101 = vector.shape_cast %100 : vector<16xf32> to vector<16x1xf32>
      %cst_50 = arith.constant 1.000000e-24 : f32
      %102 = vector.broadcast %cst_50 : f32 to vector<16x1xf32>
      %103 = arith.maximumf %101, %102 : vector<16x1xf32>
      %104 = math.rsqrt %103 : vector<16x1xf32>
      %105 = vector.broadcast %104 : vector<16x1xf32> to vector<16x32xf32>
      %106 = arith.mulf %98, %105 : vector<16x32xf32>
      %c0_51 = arith.constant 0 : index
      %c0_52 = arith.constant 0 : index
      %107 = vector.load %arg3[%c0_51, %c0_52] : memref<16x32xf32, #tpu.memory_space<vmem>>, vector<16x32xf32>
      %108 = arith.mulf %107, %107 : vector<16x32xf32>
      %cst_53 = arith.constant dense<0.000000e+00> : vector<16xf32>
      %109 = vector.multi_reduction <add>, %108, %cst_53 [1] : vector<16x32xf32> to vector<16xf32>
      %110 = vector.shape_cast %109 : vector<16xf32> to vector<16x1xf32>
      %cst_54 = arith.constant 1.000000e-24 : f32
      %111 = vector.broadcast %cst_54 : f32 to vector<16x1xf32>
      %112 = arith.maximumf %110, %111 : vector<16x1xf32>
      %113 = math.rsqrt %112 : vector<16x1xf32>
      %114 = vector.broadcast %113 : vector<16x1xf32> to vector<16x32xf32>
      %115 = arith.mulf %107, %114 : vector<16x32xf32>
      %c0_55 = arith.constant 0 : index
      %c0_56 = arith.constant 0 : index
      %116 = vector.load %arg7[%c0_55, %c0_56] : memref<16x32xf32, #tpu.memory_space<vmem>>, vector<16x32xf32>
      tpu.vector_store %arg7[%c0_55, %c0_56], %106 {strides = array<i32>} : memref<16x32xf32, #tpu.memory_space<vmem>>, vector<16x32xf32>,
      %c0_57 = arith.constant 0 : index
      %c0_58 = arith.constant 0 : index
      %117 = vector.load %arg8[%c0_57, %c0_58] : memref<16x32xf32, #tpu.memory_space<vmem>>, vector<16x32xf32>
      tpu.vector_store %arg8[%c0_57, %c0_58], %115 {strides = array<i32>} : memref<16x32xf32, #tpu.memory_space<vmem>>, vector<16x32xf32>,
      %118 = arith.mulf %106, %115 : vector<16x32xf32>
      %cst_59 = arith.constant dense<0.000000e+00> : vector<16xf32>
      %119 = vector.multi_reduction <add>, %118, %cst_59 [1] : vector<16x32xf32> to vector<16xf32>
      %120 = vector.shape_cast %119 : vector<16xf32> to vector<16x1xf32>
      %c0_60 = arith.constant 0 : index
      %c0_61 = arith.constant 0 : index
      %121 = vector.load %arg9[%c0_60, %c0_61] : memref<16x1xf32, #tpu.memory_space<vmem>>, vector<16x1xf32>
      tpu.vector_store %arg9[%c0_60, %c0_61], %120 {strides = array<i32>} : memref<16x1xf32, #tpu.memory_space<vmem>>, vector<16x1xf32>,
      %cst_62 = arith.constant -1.000000e+30 : f32
      %122 = vector.broadcast %cst_62 : f32 to vector<16x1xf32>
      %c0_63 = arith.constant 0 : index
      %c0_64 = arith.constant 0 : index
      %123 = vector.load %arg10[%c0_63, %c0_64] : memref<16x1xf32, #tpu.memory_space<vmem>>, vector<16x1xf32>
      tpu.vector_store %arg10[%c0_63, %c0_64], %122 {strides = array<i32>} : memref<16x1xf32, #tpu.memory_space<vmem>>, vector<16x1xf32>,
      %cst_65 = arith.constant -1.000000e+30 : f32
      %124 = vector.broadcast %cst_65 : f32 to vector<16x1xf32>
      %c0_66 = arith.constant 0 : index
      %c0_67 = arith.constant 0 : index
      %125 = vector.load %arg12[%c0_66, %c0_67] : memref<16x1xf32, #tpu.memory_space<vmem>>, vector<16x1xf32>
      tpu.vector_store %arg12[%c0_66, %c0_67], %124 {strides = array<i32>} : memref<16x1xf32, #tpu.memory_space<vmem>>, vector<16x1xf32>,
      %cst_68 = arith.constant 0.000000e+00 : f32
      %126 = vector.broadcast %cst_68 : f32 to vector<16x1xf32>
      %c0_69 = arith.constant 0 : index
      %c0_70 = arith.constant 0 : index
      %127 = vector.load %arg11[%c0_69, %c0_70] : memref<16x1xf32, #tpu.memory_space<vmem>>, vector<16x1xf32>
      tpu.vector_store %arg11[%c0_69, %c0_70], %126 {strides = array<i32>} : memref<16x1xf32, #tpu.memory_space<vmem>>, vector<16x1xf32>,
      %cst_71 = arith.constant 0.000000e+00 : f32
      %128 = vector.broadcast %cst_71 : f32 to vector<16x1xf32>
      %c0_72 = arith.constant 0 : index
      %c0_73 = arith.constant 0 : index
      %129 = vector.load %arg13[%c0_72, %c0_73] : memref<16x1xf32, #tpu.memory_space<vmem>>, vector<16x1xf32>
      tpu.vector_store %arg13[%c0_72, %c0_73], %128 {strides = array<i32>} : memref<16x1xf32, #tpu.memory_space<vmem>>, vector<16x1xf32>,
    } else {
    }
    %c0 = arith.constant 0 : index
    %c0_1 = arith.constant 0 : index
    %3 = vector.load %arg4[%c0, %c0_1] : memref<16x32xf32, #tpu.memory_space<vmem>>, vector<16x32xf32>
    %4 = arith.mulf %3, %3 : vector<16x32xf32>
    %cst = arith.constant dense<0.000000e+00> : vector<16xf32>
    %5 = vector.multi_reduction <add>, %4, %cst [1] : vector<16x32xf32> to vector<16xf32>
    %6 = vector.shape_cast %5 : vector<16xf32> to vector<16x1xf32>
    %cst_2 = arith.constant 1.000000e-24 : f32
    %7 = vector.broadcast %cst_2 : f32 to vector<16x1xf32>
    %8 = arith.maximumf %6, %7 : vector<16x1xf32>
    %9 = math.rsqrt %8 : vector<16x1xf32>
    %10 = vector.broadcast %9 : vector<16x1xf32> to vector<16x32xf32>
    %11 = arith.mulf %3, %10 : vector<16x32xf32>
    %c0_3 = arith.constant 0 : index
    %c0_4 = arith.constant 0 : index
    %12 = vector.load %arg5[%c0_3, %c0_4] : memref<16x32xf32, #tpu.memory_space<vmem>>, vector<16x32xf32>
    %13 = arith.mulf %12, %12 : vector<16x32xf32>
    %cst_5 = arith.constant dense<0.000000e+00> : vector<16xf32>
    %14 = vector.multi_reduction <add>, %13, %cst_5 [1] : vector<16x32xf32> to vector<16xf32>
    %15 = vector.shape_cast %14 : vector<16xf32> to vector<16x1xf32>
    %cst_6 = arith.constant 1.000000e-24 : f32
    %16 = vector.broadcast %cst_6 : f32 to vector<16x1xf32>
    %17 = arith.maximumf %15, %16 : vector<16x1xf32>
    %18 = math.rsqrt %17 : vector<16x1xf32>
    %19 = vector.broadcast %18 : vector<16x1xf32> to vector<16x32xf32>
    %20 = arith.mulf %12, %19 : vector<16x32xf32>
    %c0_7 = arith.constant 0 : index
    %c0_8 = arith.constant 0 : index
    %21 = vector.load %arg7[%c0_7, %c0_8] : memref<16x32xf32, #tpu.memory_space<vmem>>, vector<16x32xf32>
    %c0_9 = arith.constant 0 : index
    %c0_10 = arith.constant 0 : index
    %22 = vector.load %arg8[%c0_9, %c0_10] : memref<16x32xf32, #tpu.memory_space<vmem>>, vector<16x32xf32>
    %cst_11 = arith.constant dense<0.000000e+00> : vector<16x16xf32>
    %23 = tpu.matmul %21, %11, %cst_11 {dimension_numbers = #tpu.dot_dimension_numbers<[1], [1], [0], [0], [0, 0, 1, 0], [], []>} : vector<16x32xf32>, vector<16x32xf32>, vector<16x16xf32> -> vector<16x16xf32>
    %cst_12 = arith.constant 2.000000e+01 : f32
    %24 = vector.broadcast %cst_12 : f32 to vector<16x16xf32>
    %25 = arith.mulf %23, %24 : vector<16x16xf32>
    %cst_13 = arith.constant dense<0.000000e+00> : vector<16x16xf32>
    %26 = tpu.matmul %21, %20, %cst_13 {dimension_numbers = #tpu.dot_dimension_numbers<[1], [1], [0], [0], [0, 0, 1, 0], [], []>} : vector<16x32xf32>, vector<16x32xf32>, vector<16x16xf32> -> vector<16x16xf32>
    %cst_14 = arith.constant 2.000000e+01 : f32
    %27 = vector.broadcast %cst_14 : f32 to vector<16x16xf32>
    %28 = arith.mulf %26, %27 : vector<16x16xf32>
    %cst_15 = arith.constant dense<0.000000e+00> : vector<16x16xf32>
    %29 = tpu.matmul %22, %11, %cst_15 {dimension_numbers = #tpu.dot_dimension_numbers<[1], [1], [0], [0], [0, 0, 1, 0], [], []>} : vector<16x32xf32>, vector<16x32xf32>, vector<16x16xf32> -> vector<16x16xf32>
    %cst_16 = arith.constant 2.000000e+01 : f32
    %30 = vector.broadcast %cst_16 : f32 to vector<16x16xf32>
    %31 = arith.mulf %29, %30 : vector<16x16xf32>
    %cst_17 = arith.constant dense<0.000000e+00> : vector<16x16xf32>
    %32 = tpu.matmul %22, %20, %cst_17 {dimension_numbers = #tpu.dot_dimension_numbers<[1], [1], [0], [0], [0, 0, 1, 0], [], []>} : vector<16x32xf32>, vector<16x32xf32>, vector<16x16xf32> -> vector<16x16xf32>
    %cst_18 = arith.constant 2.000000e+01 : f32
    %33 = vector.broadcast %cst_18 : f32 to vector<16x16xf32>
    %34 = arith.mulf %32, %33 : vector<16x16xf32>
    %35 = tpu.iota {dimensions = array<i32: 0>} : vector<16x16xi32>
    %36 = tpu.iota {dimensions = array<i32: 1>} : vector<16x16xi32>
    %37 = arith.cmpi eq, %35, %36 : vector<16x16xi32>
    %38 = arith.cmpi eq, %arg0, %arg1 : i32
    %39 = vector.broadcast %38 : i1 to vector<16x16xi1>
    %40 = arith.andi %37, %39 : vector<16x16xi1>
    %cst_19 = arith.constant -1.000000e+30 : f32
    %41 = vector.broadcast %cst_19 : f32 to vector<16x16xf32>
    %42 = arith.select %40, %41, %25 : vector<16x16xi1>, vector<16x16xf32>
    %cst_20 = arith.constant -1.000000e+30 : f32
    %43 = vector.broadcast %cst_20 : f32 to vector<16x16xf32>
    %44 = arith.select %40, %43, %34 : vector<16x16xi1>, vector<16x16xf32>
    %c0_21 = arith.constant 0 : index
    %c0_22 = arith.constant 0 : index
    %45 = vector.load %arg10[%c0_21, %c0_22] : memref<16x1xf32, #tpu.memory_space<vmem>>, vector<16x1xf32>
    %cst_23 = arith.constant dense<0xFF800000> : vector<16xf32>
    %46 = vector.multi_reduction <maximumf>, %42, %cst_23 [1] : vector<16x16xf32> to vector<16xf32>
    %47 = vector.shape_cast %46 : vector<16xf32> to vector<16x1xf32>
    %cst_24 = arith.constant dense<0xFF800000> : vector<16xf32>
    %48 = vector.multi_reduction <maximumf>, %28, %cst_24 [1] : vector<16x16xf32> to vector<16xf32>
    %49 = vector.shape_cast %48 : vector<16xf32> to vector<16x1xf32>
    %50 = arith.maximumf %47, %49 : vector<16x1xf32>
    %51 = arith.maximumf %45, %50 : vector<16x1xf32>
    %c0_25 = arith.constant 0 : index
    %c0_26 = arith.constant 0 : index
    %52 = vector.load %arg11[%c0_25, %c0_26] : memref<16x1xf32, #tpu.memory_space<vmem>>, vector<16x1xf32>
    %53 = arith.subf %45, %51 : vector<16x1xf32>
    %54 = math.exp %53 : vector<16x1xf32>
    %55 = arith.mulf %52, %54 : vector<16x1xf32>
    %56 = vector.broadcast %51 : vector<16x1xf32> to vector<16x16xf32>
    %57 = arith.subf %42, %56 : vector<16x16xf32>
    %58 = math.exp %57 : vector<16x16xf32>
    %cst_27 = arith.constant dense<0.000000e+00> : vector<16xf32>
    %59 = vector.multi_reduction <add>, %58, %cst_27 [1] : vector<16x16xf32> to vector<16xf32>
    %60 = vector.shape_cast %59 : vector<16xf32> to vector<16x1xf32>
    %61 = arith.addf %55, %60 : vector<16x1xf32>
    %62 = vector.broadcast %51 : vector<16x1xf32> to vector<16x16xf32>
    %63 = arith.subf %28, %62 : vector<16x16xf32>
    %64 = math.exp %63 : vector<16x16xf32>
    %cst_28 = arith.constant dense<0.000000e+00> : vector<16xf32>
    %65 = vector.multi_reduction <add>, %64, %cst_28 [1] : vector<16x16xf32> to vector<16xf32>
    %66 = vector.shape_cast %65 : vector<16xf32> to vector<16x1xf32>
    %67 = arith.addf %61, %66 : vector<16x1xf32>
    %c0_29 = arith.constant 0 : index
    %c0_30 = arith.constant 0 : index
    %68 = vector.load %arg11[%c0_29, %c0_30] : memref<16x1xf32, #tpu.memory_space<vmem>>, vector<16x1xf32>
    tpu.vector_store %arg11[%c0_29, %c0_30], %67 {strides = array<i32>} : memref<16x1xf32, #tpu.memory_space<vmem>>, vector<16x1xf32>,
    %c0_31 = arith.constant 0 : index
    %c0_32 = arith.constant 0 : index
    %69 = vector.load %arg10[%c0_31, %c0_32] : memref<16x1xf32, #tpu.memory_space<vmem>>, vector<16x1xf32>
    tpu.vector_store %arg10[%c0_31, %c0_32], %51 {strides = array<i32>} : memref<16x1xf32, #tpu.memory_space<vmem>>, vector<16x1xf32>,
    %c0_33 = arith.constant 0 : index
    %c0_34 = arith.constant 0 : index
    %70 = vector.load %arg12[%c0_33, %c0_34] : memref<16x1xf32, #tpu.memory_space<vmem>>, vector<16x1xf32>
    %cst_35 = arith.constant dense<0xFF800000> : vector<16xf32>
    %71 = vector.multi_reduction <maximumf>, %31, %cst_35 [1] : vector<16x16xf32> to vector<16xf32>
    %72 = vector.shape_cast %71 : vector<16xf32> to vector<16x1xf32>
    %cst_36 = arith.constant dense<0xFF800000> : vector<16xf32>
    %73 = vector.multi_reduction <maximumf>, %44, %cst_36 [1] : vector<16x16xf32> to vector<16xf32>
    %74 = vector.shape_cast %73 : vector<16xf32> to vector<16x1xf32>
    %75 = arith.maximumf %72, %74 : vector<16x1xf32>
    %76 = arith.maximumf %70, %75 : vector<16x1xf32>
    %c0_37 = arith.constant 0 : index
    %c0_38 = arith.constant 0 : index
    %77 = vector.load %arg13[%c0_37, %c0_38] : memref<16x1xf32, #tpu.memory_space<vmem>>, vector<16x1xf32>
    %78 = arith.subf %70, %76 : vector<16x1xf32>
    %79 = math.exp %78 : vector<16x1xf32>
    %80 = arith.mulf %77, %79 : vector<16x1xf32>
    %81 = vector.broadcast %76 : vector<16x1xf32> to vector<16x16xf32>
    %82 = arith.subf %31, %81 : vector<16x16xf32>
    %83 = math.exp %82 : vector<16x16xf32>
    %cst_39 = arith.constant dense<0.000000e+00> : vector<16xf32>
    %84 = vector.multi_reduction <add>, %83, %cst_39 [1] : vector<16x16xf32> to vector<16xf32>
    %85 = vector.shape_cast %84 : vector<16xf32> to vector<16x1xf32>
    %86 = arith.addf %80, %85 : vector<16x1xf32>
    %87 = vector.broadcast %76 : vector<16x1xf32> to vector<16x16xf32>
    %88 = arith.subf %44, %87 : vector<16x16xf32>
    %89 = math.exp %88 : vector<16x16xf32>
    %cst_40 = arith.constant dense<0.000000e+00> : vector<16xf32>
    %90 = vector.multi_reduction <add>, %89, %cst_40 [1] : vector<16x16xf32> to vector<16xf32>
    %91 = vector.shape_cast %90 : vector<16xf32> to vector<16x1xf32>
    %92 = arith.addf %86, %91 : vector<16x1xf32>
    %c0_41 = arith.constant 0 : index
    %c0_42 = arith.constant 0 : index
    %93 = vector.load %arg13[%c0_41, %c0_42] : memref<16x1xf32, #tpu.memory_space<vmem>>, vector<16x1xf32>
    tpu.vector_store %arg13[%c0_41, %c0_42], %92 {strides = array<i32>} : memref<16x1xf32, #tpu.memory_space<vmem>>, vector<16x1xf32>,
    %c0_43 = arith.constant 0 : index
    %c0_44 = arith.constant 0 : index
    %94 = vector.load %arg12[%c0_43, %c0_44] : memref<16x1xf32, #tpu.memory_space<vmem>>, vector<16x1xf32>
    tpu.vector_store %arg12[%c0_43, %c0_44], %76 {strides = array<i32>} : memref<16x1xf32, #tpu.memory_space<vmem>>, vector<16x1xf32>,
    %c0_i32_45 = arith.constant 0 : i32
    %95 = arith.cmpi eq, %arg1, %c0_i32_45 : i32
    %96 = arith.extui %95 : i1 to i32
    %c0_i32_46 = arith.constant 0 : i32
    %97 = arith.cmpi ne, %96, %c0_i32_46 : i32
    scf.if %97 {
      %c0_47 = arith.constant 0 : index
      %c0_48 = arith.constant 0 : index
      %98 = vector.load %arg10[%c0_47, %c0_48] : memref<16x1xf32, #tpu.memory_space<vmem>>, vector<16x1xf32>
      %c0_49 = arith.constant 0 : index
      %c0_50 = arith.constant 0 : index
      %99 = vector.load %arg11[%c0_49, %c0_50] : memref<16x1xf32, #tpu.memory_space<vmem>>, vector<16x1xf32>
      %100 = math.log %99 : vector<16x1xf32>
      %101 = arith.addf %98, %100 : vector<16x1xf32>
      %c0_51 = arith.constant 0 : index
      %c0_52 = arith.constant 0 : index
      %102 = vector.load %arg12[%c0_51, %c0_52] : memref<16x1xf32, #tpu.memory_space<vmem>>, vector<16x1xf32>
      %c0_53 = arith.constant 0 : index
      %c0_54 = arith.constant 0 : index
      %103 = vector.load %arg13[%c0_53, %c0_54] : memref<16x1xf32, #tpu.memory_space<vmem>>, vector<16x1xf32>
      %104 = math.log %103 : vector<16x1xf32>
      %105 = arith.addf %102, %104 : vector<16x1xf32>
      %106 = arith.addf %101, %105 : vector<16x1xf32>
      %c0_55 = arith.constant 0 : index
      %c0_56 = arith.constant 0 : index
      %107 = vector.load %arg9[%c0_55, %c0_56] : memref<16x1xf32, #tpu.memory_space<vmem>>, vector<16x1xf32>
      %cst_57 = arith.constant 4.000000e+01 : f32
      %108 = vector.broadcast %cst_57 : f32 to vector<16x1xf32>
      %109 = arith.mulf %108, %107 : vector<16x1xf32>
      %110 = arith.subf %106, %109 : vector<16x1xf32>
      %c0_58 = arith.constant 0 : index
      %c0_59 = arith.constant 0 : index
      %111 = vector.load %arg6[%c0_58, %c0_59] : memref<16x1xf32, #tpu.memory_space<vmem>>, vector<16x1xf32>
      tpu.vector_store %arg6[%c0_58, %c0_59], %110 {strides = array<i32>} : memref<16x1xf32, #tpu.memory_space<vmem>>, vector<16x1xf32>,
    } else {
    }
    return
  }
  func.func @transform_0(%arg0: i32, %arg1: i32) -> (i32, i32) {
    %c0_i32 = arith.constant 0 : i32
    %c0_i32_0 = arith.constant 0 : i32
    return %arg0, %c0_i32 : i32, i32
  }
  func.func @transform_1(%arg0: i32, %arg1: i32) -> (i32, i32) {
    %c0_i32 = arith.constant 0 : i32
    %c0_i32_0 = arith.constant 0 : i32
    return %arg0, %c0_i32 : i32, i32
  }
  func.func @transform_2(%arg0: i32, %arg1: i32) -> (i32, i32) {
    %c0_i32 = arith.constant 0 : i32
    %c0_i32_0 = arith.constant 0 : i32
    return %arg1, %c0_i32 : i32, i32
  }
  func.func @transform_3(%arg0: i32, %arg1: i32) -> (i32, i32) {
    %c0_i32 = arith.constant 0 : i32
    %c0_i32_0 = arith.constant 0 : i32
    return %arg1, %c0_i32 : i32, i32
  }
  func.func @transform_4(%arg0: i32, %arg1: i32) -> (i32, i32) {
    %c0_i32 = arith.constant 0 : i32
    %c0_i32_0 = arith.constant 0 : i32
    return %arg0, %c0_i32 : i32, i32
  }
}

</mosaic_0001>

<llo_original>
// kernel: tpu_custom_call.1
$region0: #{tpu_custom_call.1}
  #allocation0 [shape = 'u32[]', space=smem, size = 0x4, offset = 0x4, fixed_abs, tag = 'smem constant byte address 0x4 - core index']
  #allocation1 [shape = 'u32[144,128]{1,0:T(1,128)}', space=vmem, size = 0x12000, scoped, tag = 'internal scratch']
  #allocation2 [shape = 'f32[16,32]{1,0:T(8,128)}', space=vmem, size = 0x2000, scoped, tag = 'scratch operand']
  #allocation3 [shape = 'f32[16,32]{1,0:T(8,128)}', space=vmem, size = 0x2000, scoped, tag = 'scratch operand']
  #allocation4 [shape = 'f32[16,1]{1,0:T(8,128)}', space=vmem, size = 0x2000, scoped, tag = 'scratch operand']
  #allocation5 [shape = 'f32[16,1]{1,0:T(8,128)}', space=vmem, size = 0x2000, scoped, tag = 'scratch operand']
  #allocation6 [shape = 'f32[16,1]{1,0:T(8,128)}', space=vmem, size = 0x2000, scoped, tag = 'scratch operand']
  #allocation7 [shape = 'f32[16,1]{1,0:T(8,128)}', space=vmem, size = 0x2000, scoped, tag = 'scratch operand']
  #allocation8 [shape = 'f32[16,1]{1,0:T(8,128)}', space=vmem, size = 0x2000, scoped, tag = 'scratch operand']
  %s0 = inlined_call_operand.hbm [shape: f32[16,32], index: 0, kind: input, shape index: {}]
  %s1 = inlined_call_operand.hbm [shape: f32[16,32], index: 1, kind: input, shape index: {}]
  %s2 = inlined_call_operand.hbm [shape: f32[16,32], index: 2, kind: input, shape index: {}]
  %s3 = inlined_call_operand.hbm [shape: f32[16,32], index: 3, kind: input, shape index: {}]
  %s4 = inlined_call_operand.vmem [shape: f32[16,1], index: 4, kind: output, shape index: {}]
  %s5 = sld [smem:[#allocation0]]
  $region50: #{tpu_custom_call.1} parent=0
    _
  %s7 = ssub.s32 1, %s5
  %s8 = scalar_select 0, %s7, %s5
  $region1: #{tpu_custom_call.1} parent=0
    #allocation9 [shape = 'u8[8192]{0}', space=vmem, size = 0x2000, scoped, tag = 'input window, operand 0, single buffered']
    #allocation10 [shape = 's32[1]{0}', space=sflag, size = 0x4, scoped, tag = 'scoped memory for tpu_custom_call.1']
    #allocation11 [shape = 'u8[8192]{0}', space=vmem, size = 0x2000, scoped, tag = 'input window, operand 1, single buffered']
    #allocation12 [shape = 's32[1]{0}', space=sflag, size = 0x4, scoped, tag = 'scoped memory for tpu_custom_call.1']
    #allocation13 [shape = 'u8[8192]{0}', space=vmem, size = 0x2000, scoped, tag = 'input window, operand 2, single buffered']
    #allocation14 [shape = 'u8[8192]{0}', space=vmem, size = 0x2000, scoped, tag = 'input window, operand 3, single buffered']
    #allocation15 [shape = 's32[1]{0}', space=sflag, size = 0x4, scoped, tag = 'scoped memory for tpu_custom_call.1']
    %9 = vsyncpa [#allocation10], 0
    %10 = vsyncpa [#allocation12], 0
    %11 = vsyncpa [#allocation15], 0
    // Predicated region
    $region2: #{tpu_custom_call.1} parent=1 // pred_check
      _
    $region3: #{tpu_custom_call.1} parent=1 // pred_check_branch
      %13 = sbr.rel (0) target = $region5
    $region4: #{tpu_custom_call.1} parent=1 // pred_region
      %s15 = ssub.s32 256, 256
      %16 = vsyncadd [#allocation10], %s15
      %s17 = sshll.u32 [#allocation9], 4
      %s18 = int_to_ptr.vmem [resolvable:$true] %s17
      %23 = dma.hbm_to_vmem [thread:$0]  %s0, 256, %s18, [#allocation10], 128, 128, 8
    $region5: #{tpu_custom_call.1} parent=1 // pred_fallthru
      _
    // Predicated region
    $region6: #{tpu_custom_call.1} parent=1 // pred_check
      _
    $region7: #{tpu_custom_call.1} parent=1 // pred_check_branch
      %25 = sbr.rel (0) target = $region9
    $region8: #{tpu_custom_call.1} parent=1 // pred_region
      %s27 = ssub.s32 256, 256
      %28 = vsyncadd [#allocation12], %s27
      %s29 = sshll.u32 [#allocation11], 4
      %s30 = int_to_ptr.vmem [resolvable:$true] %s29
      %35 = dma.hbm_to_vmem [thread:$0]  %s1, 256, %s30, [#allocation12], 128, 128, 8
    $region9: #{tpu_custom_call.1} parent=1 // pred_fallthru
      _
    // Predicated region
    $region10: #{tpu_custom_call.1} parent=1 // pred_check
      _
    $region11: #{tpu_custom_call.1} parent=1 // pred_check_branch
      %37 = sbr.rel (0) target = $region13
    $region12: #{tpu_custom_call.1} parent=1 // pred_region
      %s39 = ssub.s32 256, 256
      %40 = vsyncadd [#allocation12], %s39
      %s41 = sshll.u32 [#allocation13], 4
      %s42 = int_to_ptr.vmem [resolvable:$true] %s41
      %47 = dma.hbm_to_vmem [thread:$0]  %s2, 256, %s42, [#allocation12], 128, 128, 8
    $region13: #{tpu_custom_call.1} parent=1 // pred_fallthru
      _
    // Predicated region
    $region14: #{tpu_custom_call.1} parent=1 // pred_check
      _
    $region15: #{tpu_custom_call.1} parent=1 // pred_check_branch
      %49 = sbr.rel (0) target = $region17
    $region16: #{tpu_custom_call.1} parent=1 // pred_region
      %s51 = ssub.s32 256, 256
      %52 = vsyncadd [#allocation15], %s51
      %s53 = sshll.u32 [#allocation14], 4
      %s54 = int_to_ptr.vmem [resolvable:$true] %s53
      %59 = dma.hbm_to_vmem [thread:$0]  %s3, 256, %s54, [#allocation15], 128, 128, 8
    $region17: #{tpu_custom_call.1} parent=1 // pred_fallthru
      _
    // Predicated region
    $region18: #{tpu_custom_call.1} parent=1 // pred_check
      _
    $region19: #{tpu_custom_call.1} parent=1 // pred_check_branch
      %61 = sbr.rel (0) target = $region21
    $region20: #{tpu_custom_call.1} parent=1 // pred_region
      %62 = dma.done [#allocation10], 256
    $region21: #{tpu_custom_call.1} parent=1 // pred_fallthru
      _
    // Predicated region
    $region22: #{tpu_custom_call.1} parent=1 // pred_check
      _
    $region23: #{tpu_custom_call.1} parent=1 // pred_check_branch
      %64 = sbr.rel (0) target = $region25
    $region24: #{tpu_custom_call.1} parent=1 // pred_region
      %65 = dma.done [#allocation12], 256
    $region25: #{tpu_custom_call.1} parent=1 // pred_fallthru
      _
    // Predicated region
    $region26: #{tpu_custom_call.1} parent=1 // pred_check
      _
    $region27: #{tpu_custom_call.1} parent=1 // pred_check_branch
      %67 = sbr.rel (0) target = $region29
    $region28: #{tpu_custom_call.1} parent=1 // pred_region
      %68 = dma.done [#allocation12], 256
    $region29: #{tpu_custom_call.1} parent=1 // pred_fallthru
      _
    // Predicated region
    $region30: #{tpu_custom_call.1} parent=1 // pred_check
      _
    $region31: #{tpu_custom_call.1} parent=1 // pred_check_branch
      %70 = sbr.rel (0) target = $region33
    $region32: #{tpu_custom_call.1} parent=1 // pred_region
      %71 = dma.done [#allocation15], 256
    $region33: #{tpu_custom_call.1} parent=1 // pred_fallthru
      _
    %p72 = scmp.eq.s32.totalorder 0, 0
    // Predicated region
    $region34: #{tpu_custom_call.1} parent=1 // pred_check
      %p73 = pneg %p72
    $region35: #{tpu_custom_call.1} parent=1 // pred_check_branch
      %75 = sbr.rel (%p73) target = $region37
    $region36: #{tpu_custom_call.1} parent=1 // pred_region
      %v76 = vld [vmem:[#allocation9] sm:$0xff]
      %v77 = vld [vmem:[#allocation9 + $0x8] sm:$0xff]
      %v78 = vmul.f32 %v76, %v76
      %v79 = vmul.f32 %v77, %v77
      %vm80 = vcmask 261120
      %v81 = vsel %vm80, %v78, 0.0
      %82 = vadd.xlane.f32.xlu0 %v81
      %v83 = vpop.xlane.xlu0 %82
      %v84 = vsel %vm80, %v79, 0.0
      %85 = vadd.xlane.f32.xlu0 %v84
      %v86 = vpop.xlane.xlu0 %85
      %v87 = vmax.f32 %v83, 1e-24
      %v88 = vmax.f32 %v86, 1e-24
      %v89 = vrsqrt.pop %v87
      %v90 = vrsqrt.pop %v88
      %v91 = vmul.f32 %v76, %v89
      %v92 = vmul.f32 %v77, %v90
      %v93 = vld [vmem:[#allocation11] sm:$0xff]
      %v94 = vld [vmem:[#allocation11 + $0x8] sm:$0xff]
      %v95 = vmul.f32 %v93, %v93
      %v96 = vmul.f32 %v94, %v94
      %v97 = vsel %vm80, %v95, 0.0
      %98 = vadd.xlane.f32.xlu0 %v97
      %v99 = vpop.xlane.xlu0 %98
      %v100 = vsel %vm80, %v96, 0.0
      %101 = vadd.xlane.f32.xlu0 %v100
      %v102 = vpop.xlane.xlu0 %101
      %v103 = vmax.f32 %v99, 1e-24
      %v104 = vmax.f32 %v102, 1e-24
      %v105 = vrsqrt.pop %v103
      %v106 = vrsqrt.pop %v104
      %v107 = vmul.f32 %v93, %v105
      %v108 = vmul.f32 %v94, %v106
      %109 = vst.msk [vmem:[#allocation2] sm:$0xff] %vm80, %v91
      %110 = vst.msk [vmem:[#allocation2 + $0x8] sm:$0xff] %vm80, %v92
      %111 = vst.msk [vmem:[#allocation3] sm:$0xff] %vm80, %v107
      %112 = vst.msk [vmem:[#allocation3 + $0x8] sm:$0xff] %vm80, %v108
      %v113 = vmul.f32 %v91, %v107
      %v114 = vmul.f32 %v92, %v108
      %v115 = vsel %vm80, %v113, 0.0
      %116 = vadd.xlane.f32.xlu0 %v115
      %v117 = vpop.xlane.xlu0 %116
      %v118 = vsel %vm80, %v114, 0.0
      %119 = vadd.xlane.f32.xlu0 %v118
      %v120 = vpop.xlane.xlu0 %119
      %vm121 = vcmask 7168
      %122 = vst.msk [vmem:[#allocation4] sm:$0xff] %vm121, %v117
      %123 = vst.msk [vmem:[#allocation4 + $0x8] sm:$0xff] %vm121, %v120
      %124 = vst.msk [vmem:[#allocation5] sm:$0xff] %vm121, -1e+30
      %125 = vst.msk [vmem:[#allocation5 + $0x8] sm:$0xff] %vm121, -1e+30
      %126 = vst.msk [vmem:[#allocation7] sm:$0xff] %vm121, -1e+30
      %127 = vst.msk [vmem:[#allocation7 + $0x8] sm:$0xff] %vm121, -1e+30
      %128 = vst.msk [vmem:[#allocation6] sm:$0xff] %vm121, 0.0
      %129 = vst.msk [vmem:[#allocation6 + $0x8] sm:$0xff] %vm121, 0.0
      %130 = vst.msk [vmem:[#allocation8] sm:$0xff] %vm121, 0.0
      %131 = vst.msk [vmem:[#allocation8 + $0x8] sm:$0xff] %vm121, 0.0
    $region37: #{tpu_custom_call.1} parent=1 // pred_fallthru
      _
    %v132 = vld [vmem:[#allocation13] sm:$0xff]
    %v133 = vld [vmem:[#allocation13 + $0x8] sm:$0xff]
    %v134 = vmul.f32 %v132, %v132
    %v135 = vmul.f32 %v133, %v133
    %vm136 = vcmask 261120
    %v137 = vsel %vm136, %v134, 0.0
    %138 = vadd.xlane.f32.xlu0 %v137
    %v139 = vpop.xlane.xlu0 %138
    %v140 = vsel %vm136, %v135, 0.0
    %141 = vadd.xlane.f32.xlu0 %v140
    %v142 = vpop.xlane.xlu0 %141
    %v143 = vmax.f32 %v139, 1e-24
    %v144 = vmax.f32 %v142, 1e-24
    %v145 = vrsqrt.pop %v143
    %v146 = vrsqrt.pop %v144
    %v147 = vmul.f32 %v132, %v145
    %v148 = vmul.f32 %v133, %v146
    %v149 = vld [vmem:[#allocation14] sm:$0xff]
    %v150 = vld [vmem:[#allocation14 + $0x8] sm:$0xff]
    %v151 = vmul.f32 %v149, %v149
    %v152 = vmul.f32 %v150, %v150
    %v153 = vsel %vm136, %v151, 0.0
    %154 = vadd.xlane.f32.xlu0 %v153
    %v155 = vpop.xlane.xlu0 %154
    %v156 = vsel %vm136, %v152, 0.0
    %157 = vadd.xlane.f32.xlu0 %v156
    %v158 = vpop.xlane.xlu0 %157
    %v159 = vmax.f32 %v155, 1e-24
    %v160 = vmax.f32 %v158, 1e-24
    %v161 = vrsqrt.pop %v159
    %v162 = vrsqrt.pop %v160
    %v163 = vmul.f32 %v149, %v161
    %v164 = vmul.f32 %v150, %v162
    %v165 = vld [vmem:[#allocation2] sm:$0xff]
    %v166 = vld [vmem:[#allocation2 + $0x8] sm:$0xff]
    %v167 = vld [vmem:[#allocation3] sm:$0xff]
    %v168 = vld [vmem:[#allocation3 + $0x8] sm:$0xff]
    %v170 = vsel %vm136, %v165, 0
    %v173 = vsel %vm136, %v166, 0
    %v176 = vsel %vm136, %v147, 0
    %v179 = vsel %vm136, %v148, 0
    %181 = vmatprep.subr.mxu0 0.0
    %182 = vmatpush1.xpose.msra.mxu0 %v176
    %183 = vmatprep.subr.mxu0 0.0
    %184 = vmatpush1.xpose.msra.mxu0 %v179
    %185 = vmatprep.subr.mxu0 0.0
    %186 = vmatpush1.xpose.msra.mxu0 0.0
    %187 = vmatprep.subr.mxu0 0.0
    %188 = vmatpush1.xpose.msra.mxu0 0.0
    %189 = vmatprep.subr.mxu0 0.0
    %190 = vmatpush1.xpose.msra.mxu0 0.0
    %191 = vmatprep.subr.mxu0 0.0
    %192 = vmatpush1.xpose.msra.mxu0 0.0
    %193 = vmatprep.subr.mxu0 0.0
    %194 = vmatpush1.xpose.msra.mxu0 0.0
    %195 = vmatprep.subr.mxu0 0.0
    %196 = vmatpush1.xpose.msra.mxu0 0.0
    %197 = vmatprep.subr.mxu0 0.0
    %198 = vmatpush1.xpose.msra.mxu0 0.0
    %199 = vmatprep.subr.mxu0 0.0
    %200 = vmatpush1.xpose.msra.mxu0 0.0
    %201 = vmatprep.subr.mxu0 0.0
    %202 = vmatpush1.xpose.msra.mxu0 0.0
    %203 = vmatprep.subr.mxu0 0.0
    %204 = vmatpush1.xpose.msra.mxu0 0.0
    %205 = vmatprep.subr.mxu0 0.0
    %206 = vmatpush1.xpose.msra.mxu0 0.0
    %207 = vmatprep.subr.mxu0 0.0
    %208 = vmatpush1.xpose.msra.mxu0 0.0
    %209 = vmatprep.subr.mxu0 0.0
    %210 = vmatpush1.xpose.msra.mxu0 0.0
    %211 = vmatprep.subr.mxu0 0.0
    %212 = vmatpush1.xpose.msra.mxu0 0.0
    %213 = vmatprep.subr.mxu0 0.0
    %214 = vmatpush1.xpose.msra.mxu0 0.0
    %215 = vmatprep.subr.mxu0 0.0
    %216 = vmatpush1.xpose.msra.mxu0 0.0
    %217 = vmatprep.subr.mxu0 0.0
    %218 = vmatpush1.xpose.msra.mxu0 0.0
    %219 = vmatprep.subr.mxu0 0.0
    %220 = vmatpush1.xpose.msra.mxu0 0.0
    %221 = vmatprep.subr.mxu0 0.0
    %222 = vmatpush1.xpose.msra.mxu0 0.0
    %223 = vmatprep.subr.mxu0 0.0
    %224 = vmatpush1.xpose.msra.mxu0 0.0
    %225 = vmatprep.subr.mxu0 0.0
    %226 = vmatpush1.xpose.msra.mxu0 0.0
    %227 = vmatprep.subr.mxu0 0.0
    %228 = vmatpush1.xpose.msra.mxu0 0.0
    %229 = vmatprep.subr.mxu0 0.0
    %230 = vmatpush1.xpose.msra.mxu0 0.0
    %231 = vmatprep.subr.mxu0 0.0
    %232 = vmatpush1.xpose.msra.mxu0 0.0
    %233 = vmatprep.subr.mxu0 0.0
    %234 = vmatpush1.xpose.msra.mxu0 0.0
    %235 = vmatprep.subr.mxu0 0.0
    %236 = vmatpush1.xpose.msra.mxu0 0.0
    %237 = vmatprep.subr.mxu0 0.0
    %238 = vmatpush1.xpose.msra.mxu0 0.0
    %239 = vmatprep.subr.mxu0 0.0
    %240 = vmatpush1.xpose.msra.mxu0 0.0
    %241 = vmatprep.subr.mxu0 0.0
    %242 = vmatpush1.xpose.msra.mxu0 0.0
    %243 = vmatprep.subr.mxu0 0.0
    %244 = vmatpush1.xpose.msra.mxu0 0.0
    %245 = vmatprep.mubr.f32.mxu0 0.0
    %246 = vmatmul.mubr.f32.gmra.mrb[0].mxu0 %v170
    %v247 = vpop.f32.mrb[0].mxu0
    %v248 = vadd.f32 0.0, %v247
    %v249 = vpop.f32.mrb[0].mxu0
    %250 = vmatprep.mubr.f32.mxu0 0.0
    %251 = vmatmul.mubr.f32.gmra.mrb[0].mxu0 %v173
    %v252 = vpop.f32.mrb[0].mxu0
    %v253 = vadd.f32 0.0, %v252
    %v254 = vpop.f32.mrb[0].mxu0
    %255 = vdwg.mxu0
    %v256 = vmul.f32 %v248, 20.0
    %v257 = vmul.f32 %v253, 20.0
    %v259 = vsel %vm136, %v163, 0
    %v262 = vsel %vm136, %v164, 0
    %264 = vmatprep.subr.mxu0 0.0
    %265 = vmatpush1.xpose.msra.mxu0 %v259
    %266 = vmatprep.subr.mxu0 0.0
    %267 = vmatpush1.xpose.msra.mxu0 %v262
    %268 = vmatprep.subr.mxu0 0.0
    %269 = vmatpush1.xpose.msra.mxu0 0.0
    %270 = vmatprep.subr.mxu0 0.0
    %271 = vmatpush1.xpose.msra.mxu0 0.0
    %272 = vmatprep.subr.mxu0 0.0
    %273 = vmatpush1.xpose.msra.mxu0 0.0
    %274 = vmatprep.subr.mxu0 0.0
    %275 = vmatpush1.xpose.msra.mxu0 0.0
    %276 = vmatprep.subr.mxu0 0.0
    %277 = vmatpush1.xpose.msra.mxu0 0.0
    %278 = vmatprep.subr.mxu0 0.0
    %279 = vmatpush1.xpose.msra.mxu0 0.0
    %280 = vmatprep.subr.mxu0 0.0
    %281 = vmatpush1.xpose.msra.mxu0 0.0
    %282 = vmatprep.subr.mxu0 0.0
    %283 = vmatpush1.xpose.msra.mxu0 0.0
    %284 = vmatprep.subr.mxu0 0.0
    %285 = vmatpush1.xpose.msra.mxu0 0.0
    %286 = vmatprep.subr.mxu0 0.0
    %287 = vmatpush1.xpose.msra.mxu0 0.0
    %288 = vmatprep.subr.mxu0 0.0
    %289 = vmatpush1.xpose.msra.mxu0 0.0
    %290 = vmatprep.subr.mxu0 0.0
    %291 = vmatpush1.xpose.msra.mxu0 0.0
    %292 = vmatprep.subr.mxu0 0.0
    %293 = vmatpush1.xpose.msra.mxu0 0.0
    %294 = vmatprep.subr.mxu0 0.0
    %295 = vmatpush1.xpose.msra.mxu0 0.0
    %296 = vmatprep.subr.mxu0 0.0
    %297 = vmatpush1.xpose.msra.mxu0 0.0
    %298 = vmatprep.subr.mxu0 0.0
    %299 = vmatpush1.xpose.msra.mxu0 0.0
    %300 = vmatprep.subr.mxu0 0.0
    %301 = vmatpush1.xpose.msra.mxu0 0.0
    %302 = vmatprep.subr.mxu0 0.0
    %303 = vmatpush1.xpose.msra.mxu0 0.0
    %304 = vmatprep.subr.mxu0 0.0
    %305 = vmatpush1.xpose.msra.mxu0 0.0
    %306 = vmatprep.subr.mxu0 0.0
    %307 = vmatpush1.xpose.msra.mxu0 0.0
    %308 = vmatprep.subr.mxu0 0.0
    %309 = vmatpush1.xpose.msra.mxu0 0.0
    %310 = vmatprep.subr.mxu0 0.0
    %311 = vmatpush1.xpose.msra.mxu0 0.0
    %312 = vmatprep.subr.mxu0 0.0
    %313 = vmatpush1.xpose.msra.mxu0 0.0
    %314 = vmatprep.subr.mxu0 0.0
    %315 = vmatpush1.xpose.msra.mxu0 0.0
    %316 = vmatprep.subr.mxu0 0.0
    %317 = vmatpush1.xpose.msra.mxu0 0.0
    %318 = vmatprep.subr.mxu0 0.0
    %319 = vmatpush1.xpose.msra.mxu0 0.0
    %320 = vmatprep.subr.mxu0 0.0
    %321 = vmatpush1.xpose.msra.mxu0 0.0
    %322 = vmatprep.subr.mxu0 0.0
    %323 = vmatpush1.xpose.msra.mxu0 0.0
    %324 = vmatprep.subr.mxu0 0.0
    %325 = vmatpush1.xpose.msra.mxu0 0.0
    %326 = vmatprep.subr.mxu0 0.0
    %327 = vmatpush1.xpose.msra.mxu0 0.0
    %328 = vmatprep.mubr.f32.mxu0 0.0
    %329 = vmatmul.mubr.f32.gmra.mrb[0].mxu0 %v170
    %v330 = vpop.f32.mrb[0].mxu0
    %v331 = vadd.f32 0.0, %v330
    %v332 = vpop.f32.mrb[0].mxu0
    %333 = vmatprep.mubr.f32.mxu0 0.0
    %334 = vmatmul.mubr.f32.gmra.mrb[0].mxu0 %v173
    %v335 = vpop.f32.mrb[0].mxu0
    %v336 = vadd.f32 0.0, %v335
    %v337 = vpop.f32.mrb[0].mxu0
    %338 = vdwg.mxu0
    %v339 = vmul.f32 %v331, 20.0
    %v340 = vmul.f32 %v336, 20.0
    %v342 = vsel %vm136, %v167, 0
    %v345 = vsel %vm136, %v168, 0
    %347 = vmatprep.subr.mxu0 0.0
    %348 = vmatpush1.xpose.msra.mxu0 %v176
    %349 = vmatprep.subr.mxu0 0.0
    %350 = vmatpush1.xpose.msra.mxu0 %v179
    %351 = vmatprep.subr.mxu0 0.0
    %352 = vmatpush1.xpose.msra.mxu0 0.0
    %353 = vmatprep.subr.mxu0 0.0
    %354 = vmatpush1.xpose.msra.mxu0 0.0
    %355 = vmatprep.subr.mxu0 0.0
    %356 = vmatpush1.xpose.msra.mxu0 0.0
    %357 = vmatprep.subr.mxu0 0.0
    %358 = vmatpush1.xpose.msra.mxu0 0.0
    %359 = vmatprep.subr.mxu0 0.0
    %360 = vmatpush1.xpose.msra.mxu0 0.0
    %361 = vmatprep.subr.mxu0 0.0
    %362 = vmatpush1.xpose.msra.mxu0 0.0
    %363 = vmatprep.subr.mxu0 0.0
    %364 = vmatpush1.xpose.msra.mxu0 0.0
    %365 = vmatprep.subr.mxu0 0.0
    %366 = vmatpush1.xpose.msra.mxu0 0.0
    %367 = vmatprep.subr.mxu0 0.0
    %368 = vmatpush1.xpose.msra.mxu0 0.0
    %369 = vmatprep.subr.mxu0 0.0
    %370 = vmatpush1.xpose.msra.mxu0 0.0
    %371 = vmatprep.subr.mxu0 0.0
    %372 = vmatpush1.xpose.msra.mxu0 0.0
    %373 = vmatprep.subr.mxu0 0.0
    %374 = vmatpush1.xpose.msra.mxu0 0.0
    %375 = vmatprep.subr.mxu0 0.0
    %376 = vmatpush1.xpose.msra.mxu0 0.0
    %377 = vmatprep.subr.mxu0 0.0
    %378 = vmatpush1.xpose.msra.mxu0 0.0
    %379 = vmatprep.subr.mxu0 0.0
    %380 = vmatpush1.xpose.msra.mxu0 0.0
    %381 = vmatprep.subr.mxu0 0.0
    %382 = vmatpush1.xpose.msra.mxu0 0.0
    %383 = vmatprep.subr.mxu0 0.0
    %384 = vmatpush1.xpose.msra.mxu0 0.0
    %385 = vmatprep.subr.mxu0 0.0
    %386 = vmatpush1.xpose.msra.mxu0 0.0
    %387 = vmatprep.subr.mxu0 0.0
    %388 = vmatpush1.xpose.msra.mxu0 0.0
    %389 = vmatprep.subr.mxu0 0.0
    %390 = vmatpush1.xpose.msra.mxu0 0.0
    %391 = vmatprep.subr.mxu0 0.0
    %392 = vmatpush1.xpose.msra.mxu0 0.0
    %393 = vmatprep.subr.mxu0 0.0
    %394 = vmatpush1.xpose.msra.mxu0 0.0
    %395 = vmatprep.subr.mxu0 0.0
    %396 = vmatpush1.xpose.msra.mxu0 0.0
    %397 = vmatprep.subr.mxu0 0.0
    %398 = vmatpush1.xpose.msra.mxu0 0.0
    %399 = vmatprep.subr.mxu0 0.0
    %400 = vmatpush1.xpose.msra.mxu0 0.0
    %401 = vmatprep.subr.mxu0 0.0
    %402 = vmatpush1.xpose.msra.mxu0 0.0
    %403 = vmatprep.subr.mxu0 0.0
    %404 = vmatpush1.xpose.msra.mxu0 0.0
    %405 = vmatprep.subr.mxu0 0.0
    %406 = vmatpush1.xpose.msra.mxu0 0.0
    %407 = vmatprep.subr.mxu0 0.0
    %408 = vmatpush1.xpose.msra.mxu0 0.0
    %409 = vmatprep.subr.mxu0 0.0
    %410 = vmatpush1.xpose.msra.mxu0 0.0
    %411 = vmatprep.mubr.f32.mxu0 0.0
    %412 = vmatmul.mubr.f32.gmra.mrb[0].mxu0 %v342
    %v413 = vpop.f32.mrb[0].mxu0
    %v414 = vadd.f32 0.0, %v413
    %v415 = vpop.f32.mrb[0].mxu0
    %416 = vmatprep.mubr.f32.mxu0 0.0
    %417 = vmatmul.mubr.f32.gmra.mrb[0].mxu0 %v345
    %v418 = vpop.f32.mrb[0].mxu0
    %v419 = vadd.f32 0.0, %v418
    %v420 = vpop.f32.mrb[0].mxu0
    %421 = vdwg.mxu0
    %v422 = vmul.f32 %v414, 20.0
    %v423 = vmul.f32 %v419, 20.0
    %424 = vmatprep.subr.mxu0 0.0
    %425 = vmatpush1.xpose.msra.mxu0 %v259
    %426 = vmatprep.subr.mxu0 0.0
    %427 = vmatpush1.xpose.msra.mxu0 %v262
    %428 = vmatprep.subr.mxu0 0.0
    %429 = vmatpush1.xpose.msra.mxu0 0.0
    %430 = vmatprep.subr.mxu0 0.0
    %431 = vmatpush1.xpose.msra.mxu0 0.0
    %432 = vmatprep.subr.mxu0 0.0
    %433 = vmatpush1.xpose.msra.mxu0 0.0
    %434 = vmatprep.subr.mxu0 0.0
    %435 = vmatpush1.xpose.msra.mxu0 0.0
    %436 = vmatprep.subr.mxu0 0.0
    %437 = vmatpush1.xpose.msra.mxu0 0.0
    %438 = vmatprep.subr.mxu0 0.0
    %439 = vmatpush1.xpose.msra.mxu0 0.0
    %440 = vmatprep.subr.mxu0 0.0
    %441 = vmatpush1.xpose.msra.mxu0 0.0
    %442 = vmatprep.subr.mxu0 0.0
    %443 = vmatpush1.xpose.msra.mxu0 0.0
    %444 = vmatprep.subr.mxu0 0.0
    %445 = vmatpush1.xpose.msra.mxu0 0.0
    %446 = vmatprep.subr.mxu0 0.0
    %447 = vmatpush1.xpose.msra.mxu0 0.0
    %448 = vmatprep.subr.mxu0 0.0
    %449 = vmatpush1.xpose.msra.mxu0 0.0
    %450 = vmatprep.subr.mxu0 0.0
    %451 = vmatpush1.xpose.msra.mxu0 0.0
    %452 = vmatprep.subr.mxu0 0.0
    %453 = vmatpush1.xpose.msra.mxu0 0.0
    %454 = vmatprep.subr.mxu0 0.0
    %455 = vmatpush1.xpose.msra.mxu0 0.0
    %456 = vmatprep.subr.mxu0 0.0
    %457 = vmatpush1.xpose.msra.mxu0 0.0
    %458 = vmatprep.subr.mxu0 0.0
    %459 = vmatpush1.xpose.msra.mxu0 0.0
    %460 = vmatprep.subr.mxu0 0.0
    %461 = vmatpush1.xpose.msra.mxu0 0.0
    %462 = vmatprep.subr.mxu0 0.0
    %463 = vmatpush1.xpose.msra.mxu0 0.0
    %464 = vmatprep.subr.mxu0 0.0
    %465 = vmatpush1.xpose.msra.mxu0 0.0
    %466 = vmatprep.subr.mxu0 0.0
    %467 = vmatpush1.xpose.msra.mxu0 0.0
    %468 = vmatprep.subr.mxu0 0.0
    %469 = vmatpush1.xpose.msra.mxu0 0.0
    %470 = vmatprep.subr.mxu0 0.0
    %471 = vmatpush1.xpose.msra.mxu0 0.0
    %472 = vmatprep.subr.mxu0 0.0
    %473 = vmatpush1.xpose.msra.mxu0 0.0
    %474 = vmatprep.subr.mxu0 0.0
    %475 = vmatpush1.xpose.msra.mxu0 0.0
    %476 = vmatprep.subr.mxu0 0.0
    %477 = vmatpush1.xpose.msra.mxu0 0.0
    %478 = vmatprep.subr.mxu0 0.0
    %479 = vmatpush1.xpose.msra.mxu0 0.0
    %480 = vmatprep.subr.mxu0 0.0
    %481 = vmatpush1.xpose.msra.mxu0 0.0
    %482 = vmatprep.subr.mxu0 0.0
    %483 = vmatpush1.xpose.msra.mxu0 0.0
    %484 = vmatprep.subr.mxu0 0.0
    %485 = vmatpush1.xpose.msra.mxu0 0.0
    %486 = vmatprep.subr.mxu0 0.0
    %487 = vmatpush1.xpose.msra.mxu0 0.0
    %488 = vmatprep.mubr.f32.mxu0 0.0
    %489 = vmatmul.mubr.f32.gmra.mrb[0].mxu0 %v342
    %v490 = vpop.f32.mrb[0].mxu0
    %v491 = vadd.f32 0.0, %v490
    %v492 = vpop.f32.mrb[0].mxu0
    %493 = vmatprep.mubr.f32.mxu0 0.0
    %494 = vmatmul.mubr.f32.gmra.mrb[0].mxu0 %v345
    %v495 = vpop.f32.mrb[0].mxu0
    %v496 = vadd.f32 0.0, %v495
    %v497 = vpop.f32.mrb[0].mxu0
    %498 = vdwg.mxu0
    %v499 = vmul.f32 %v491, 20.0
    %v500 = vmul.f32 %v496, 20.0
    %v501 = vlaneseq
    %v502 = vshrl.u32 %v501, 7
    %v503 = vadd.s32 %v502, 8
    %v504 = vlaneseq
    %v505 = vand.u32 %v504, 127
    %vm506 = vcmp.eq.s32.totalorder %v502, %v505
    %vm507 = vcmp.eq.s32.totalorder %v503, %v505
    %p508 = scmp.eq.s32.totalorder 0, 0
    %s509 = scalar_select %p508, 1, 0
    %v510 = vstv %s509
    %vm511 = vcmp.eq.s32.totalorder %v510, 1
    %vm512 = vmand %vm506, %vm511
    %vm513 = vmand %vm507, %vm511
    %v514 = vsel %vm512, -1e+30, %v256
    %v515 = vsel %vm513, -1e+30, %v257
    %v516 = vsel %vm512, -1e+30, %v499
    %v517 = vsel %vm513, -1e+30, %v500
    %v518 = vld [vmem:[#allocation5] sm:$0xff]
    %v519 = vld [vmem:[#allocation5 + $0x8] sm:$0xff]
    %vm520 = vcmask 130048
    %v521 = vsel %vm520, %v514, -inf
    %522 = vmax.xlane.f32.xlu0 %v521
    %v523 = vpop.xlane.xlu0 %522
    %v524 = vsel %vm520, %v515, -inf
    %525 = vmax.xlane.f32.xlu0 %v524
    %v526 = vpop.xlane.xlu0 %525
    %v527 = vsel %vm520, %v339, -inf
    %528 = vmax.xlane.f32.xlu0 %v527
    %v529 = vpop.xlane.xlu0 %528
    %v530 = vsel %vm520, %v340, -inf
    %531 = vmax.xlane.f32.xlu0 %v530
    %v532 = vpop.xlane.xlu0 %531
    %v533 = vmax.f32 %v523, %v529
    %v534 = vmax.f32 %v526, %v532
    %v535 = vmax.f32 %v518, %v533
    %v536 = vmax.f32 %v519, %v534
    %v537 = vld [vmem:[#allocation6] sm:$0xff]
    %v538 = vld [vmem:[#allocation6 + $0x8] sm:$0xff]
    %v539 = vsub.f32 %v518, %v535
    %v540 = vsub.f32 %v519, %v536
    %v541 = vmul.f32 %v539, 1.442695
    %v542 = vpow.pop %v541
    %v543 = vmul.f32 %v540, 1.442695
    %v544 = vpow.pop %v543
    %v545 = vmul.f32 %v537, %v542
    %v546 = vmul.f32 %v538, %v544
    %548 = vset.pattern.permute.xlu0 0
    %549 = vperm.xlu0 %548, %v535
    %v550 = vpop.permute.xlu0 %549
    %553 = vset.pattern.permute.xlu0 0
    %554 = vperm.xlu0 %553, %v536
    %v555 = vpop.permute.xlu0 %554
    %v557 = vsub.f32 %v514, %v550
    %v558 = vsub.f32 %v515, %v555
    %v559 = vmul.f32 %v557, 1.442695
    %v560 = vpow.pop %v559
    %v561 = vmul.f32 %v558, 1.442695
    %v562 = vpow.pop %v561
    %v563 = vsel %vm520, %v560, 0.0
    %564 = vadd.xlane.f32.xlu0 %v563
    %v565 = vpop.xlane.xlu0 %564
    %v566 = vsel %vm520, %v562, 0.0
    %567 = vadd.xlane.f32.xlu0 %v566
    %v568 = vpop.xlane.xlu0 %567
    %v569 = vadd.f32 %v545, %v565
    %v570 = vadd.f32 %v546, %v568
    %v571 = vsub.f32 %v339, %v550
    %v572 = vsub.f32 %v340, %v555
    %v573 = vmul.f32 %v571, 1.442695
    %v574 = vpow.pop %v573
    %v575 = vmul.f32 %v572, 1.442695
    %v576 = vpow.pop %v575
    %v577 = vsel %vm520, %v574, 0.0
    %578 = vadd.xlane.f32.xlu0 %v577
    %v579 = vpop.xlane.xlu0 %578
    %v580 = vsel %vm520, %v576, 0.0
    %581 = vadd.xlane.f32.xlu0 %v580
    %v582 = vpop.xlane.xlu0 %581
    %v583 = vadd.f32 %v569, %v579
    %v584 = vadd.f32 %v570, %v582
    %vm585 = vcmask 7168
    %586 = vst.msk [vmem:[#allocation6] sm:$0xff] %vm585, %v583
    %587 = vst.msk [vmem:[#allocation6 + $0x8] sm:$0xff] %vm585, %v584
    %588 = vst.msk [vmem:[#allocation5] sm:$0xff] %vm585, %v535
    %589 = vst.msk [vmem:[#allocation5 + $0x8] sm:$0xff] %vm585, %v536
    %v590 = vld [vmem:[#allocation7] sm:$0xff]
    %v591 = vld [vmem:[#allocation7 + $0x8] sm:$0xff]
    %v592 = vsel %vm520, %v422, -inf
    %593 = vmax.xlane.f32.xlu0 %v592
    %v594 = vpop.xlane.xlu0 %593
    %v595 = vsel %vm520, %v423, -inf
    %596 = vmax.xlane.f32.xlu0 %v595
    %v597 = vpop.xlane.xlu0 %596
    %v598 = vsel %vm520, %v516, -inf
    %599 = vmax.xlane.f32.xlu0 %v598
    %v600 = vpop.xlane.xlu0 %599
    %v601 = vsel %vm520, %v517, -inf
    %602 = vmax.xlane.f32.xlu0 %v601
    %v603 = vpop.xlane.xlu0 %602
    %v604 = vmax.f32 %v594, %v600
    %v605 = vmax.f32 %v597, %v603
    %v606 = vmax.f32 %v590, %v604
    %v607 = vmax.f32 %v591, %v605
    %v608 = vld [vmem:[#allocation8] sm:$0xff]
    %v609 = vld [vmem:[#allocation8 + $0x8] sm:$0xff]
    %v610 = vsub.f32 %v590, %v606
    %v611 = vsub.f32 %v591, %v607
    %v612 = vmul.f32 %v610, 1.442695
    %v613 = vpow.pop %v612
    %v614 = vmul.f32 %v611, 1.442695
    %v615 = vpow.pop %v614
    %v616 = vmul.f32 %v608, %v613
    %v617 = vmul.f32 %v609, %v615
    %619 = vset.pattern.permute.xlu0 0
    %620 = vperm.xlu0 %619, %v606
    %v621 = vpop.permute.xlu0 %620
    %624 = vset.pattern.permute.xlu0 0
    %625 = vperm.xlu0 %624, %v607
    %v626 = vpop.permute.xlu0 %625
    %v628 = vsub.f32 %v422, %v621
    %v629 = vsub.f32 %v423, %v626
    %v630 = vmul.f32 %v628, 1.442695
    %v631 = vpow.pop %v630
    %v632 = vmul.f32 %v629, 1.442695
    %v633 = vpow.pop %v632
    %v634 = vsel %vm520, %v631, 0.0
    %635 = vadd.xlane.f32.xlu0 %v634
    %v636 = vpop.xlane.xlu0 %635
    %v637 = vsel %vm520, %v633, 0.0
    %638 = vadd.xlane.f32.xlu0 %v637
    %v639 = vpop.xlane.xlu0 %638
    %v640 = vadd.f32 %v616, %v636
    %v641 = vadd.f32 %v617, %v639
    %v642 = vsub.f32 %v516, %v621
    %v643 = vsub.f32 %v517, %v626
    %v644 = vmul.f32 %v642, 1.442695
    %v645 = vpow.pop %v644
    %v646 = vmul.f32 %v643, 1.442695
    %v647 = vpow.pop %v646
    %v648 = vsel %vm520, %v645, 0.0
    %649 = vadd.xlane.f32.xlu0 %v648
    %v650 = vpop.xlane.xlu0 %649
    %v651 = vsel %vm520, %v647, 0.0
    %652 = vadd.xlane.f32.xlu0 %v651
    %v653 = vpop.xlane.xlu0 %652
    %v654 = vadd.f32 %v640, %v650
    %v655 = vadd.f32 %v641, %v653
    %656 = vst.msk [vmem:[#allocation8] sm:$0xff] %vm585, %v654
    %657 = vst.msk [vmem:[#allocation8 + $0x8] sm:$0xff] %vm585, %v655
    %658 = vst.msk [vmem:[#allocation7] sm:$0xff] %vm585, %v606
    %659 = vst.msk [vmem:[#allocation7 + $0x8] sm:$0xff] %vm585, %v607
    // Predicated region
    $region38: #{tpu_custom_call.1} parent=1 // pred_check
      %p660 = pneg %p72
    $region39: #{tpu_custom_call.1} parent=1 // pred_check_branch
      %662 = sbr.rel (%p660) target = $region41
    $region40: #{tpu_custom_call.1} parent=1 // pred_region
      %v663 = vld [vmem:[#allocation5] sm:$0xff]
      %v664 = vld [vmem:[#allocation5 + $0x8] sm:$0xff]
      %v665 = vld [vmem:[#allocation6] sm:$0xff]
      %v666 = vld [vmem:[#allocation6 + $0x8] sm:$0xff]
      %v667 = vlog2.pop %v665
      %v668 = vmul.f32 %v667, 0.6931472
      %v669 = vlog2.pop %v666
      %v670 = vmul.f32 %v669, 0.6931472
      %v671 = vadd.f32 %v663, %v668
      %v672 = vadd.f32 %v664, %v670
      %v673 = vld [vmem:[#allocation7] sm:$0xff]
      %v674 = vld [vmem:[#allocation7 + $0x8] sm:$0xff]
      %v675 = vld [vmem:[#allocation8] sm:$0xff]
      %v676 = vld [vmem:[#allocation8 + $0x8] sm:$0xff]
      %v677 = vlog2.pop %v675
      %v678 = vmul.f32 %v677, 0.6931472
      %v679 = vlog2.pop %v676
      %v680 = vmul.f32 %v679, 0.6931472
      %v681 = vadd.f32 %v673, %v678
      %v682 = vadd.f32 %v674, %v680
      %v683 = vadd.f32 %v671, %v681
      %v684 = vadd.f32 %v672, %v682
      %v685 = vld [vmem:[#allocation4] sm:$0xff]
      %v686 = vld [vmem:[#allocation4 + $0x8] sm:$0xff]
      %v687 = vmul.f32 %v685, 40.0
      %v688 = vmul.f32 %v686, 40.0
      %v689 = vsub.f32 %v683, %v687
      %v690 = vsub.f32 %v684, %v688
      %691 = vst.msk [vmem:[%s4] sm:$0xff] %vm585, %v689
      %692 = vst.msk [vmem:[%s4 + $0x8] sm:$0xff] %vm585, %v690
    $region41: #{tpu_custom_call.1} parent=1 // pred_fallthru
      _
    // Predicated region
    $region42: #{tpu_custom_call.1} parent=1 // pred_check
      _
    $region43: #{tpu_custom_call.1} parent=1 // pred_check_branch
      %694 = sbr.rel (0) target = $region45
    $region44: #{tpu_custom_call.1} parent=1 // pred_region
      _
    $region45: #{tpu_custom_call.1} parent=1 // pred_fallthru
      _
    // Predicated region
    $region46: #{tpu_custom_call.1} parent=1 // pred_check
      _
    $region47: #{tpu_custom_call.1} parent=1 // pred_check_branch
      %696 = sbr.rel (0) target = $region49
    $region48: #{tpu_custom_call.1} parent=1 // pred_region
      _
    $region49: #{tpu_custom_call.1} parent=1 // pred_fallthru
      _
    %697 = vsyncpa [#allocation10], 1
    %698 = vsyncpa [#allocation12], 1
    %699 = vsyncpa [#allocation15], 1

</llo_original>
